<compile_context>
chip_gen: v7x
topology: tpu7x:2x2x1
jax: 0.10.0
libtpu: 0.0.40
codegen_flags: <defaults>
</compile_context>

<pallas_src>
import functools

import jax
import jax.numpy as jnp
from jax import lax
from jax.experimental import pallas as pl
from jax.experimental.pallas import tpu as pltpu

LEAKY_SLOPE = 0.01  # nn.LeakyReLU default negative_slope


# --------------------------------------------------------------------------
# Fused kernel: pool(avg,max) -> fc1 -> LeakyReLU -> fc2 -> add -> sigmoid
# Layout: x block is (1, C, tile_hw)  (channels on sublanes, spatial on lanes)
# --------------------------------------------------------------------------
def _channel_attention_kernel(x_ref, w1_ref, w2_ref, o_ref, sum_sc, max_sc, *,
                              inv_hw, hw, slope, needs_mask):
    s = pl.program_id(1)

    @pl.when(s == 0)
    def _():
        sum_sc[...] = jnp.zeros_like(sum_sc)
        max_sc[...] = jnp.full_like(max_sc, -jnp.inf)

    xb = x_ref[0].astype(jnp.float32)      # (C, tile_hw); upcast right after load
    tile = xb.shape[-1]

    if needs_mask:
        # Ragged last tile: elements past H*W are garbage -> mask them out.
        lane = lax.broadcasted_iota(jnp.int32, (1, tile), 1)
        valid = (lane + s * tile) < hw     # (1, tile), broadcasts over channels
        xs = jnp.where(valid, xb, 0.0)
        xm = jnp.where(valid, xb, -jnp.inf)
    else:
        xs = xb
        xm = xb

    # Running spatial reductions (per-channel) kept in VMEM scratch.
    sum_sc[...] += jnp.sum(xs, axis=1, keepdims=True)                  # (C, 1)
    max_sc[...] = jnp.maximum(max_sc[...], jnp.max(xm, axis=1, keepdims=True))

    @pl.when(s == pl.num_programs(1) - 1)
    def _():
        # Column 0 = global avg pool, column 1 = global max pool.  Both
        # branches share the weights, so they share the same two matmuls.
        pooled = jnp.concatenate([sum_sc[...] * inv_hw, max_sc[...]], axis=1)  # (C, 2)
        h = jnp.dot(w1_ref[...], pooled, preferred_element_type=jnp.float32)   # (C/r, 2)
        h = jnp.where(h >= 0.0, h, slope * h)                                  # LeakyReLU
        y = jnp.dot(w2_ref[...], h, preferred_element_type=jnp.float32)        # (C, 2)
        z = y[:, 0:1] + y[:, 1:2]                                              # avg + max
        o_ref[0] = (1.0 / (1.0 + jnp.exp(-z))).astype(o_ref.dtype)             # exact sigmoid


def _pick_spatial_tile(hw, c, itemsize, budget_bytes=12 << 20):
    """Largest lane-aligned spatial tile whose DOUBLE-BUFFERED footprint fits budget.

    Returns either the full hw (single block, no lane constraint) or a
    multiple of 128 <= hw.  Never falls back to an unbounded tile.
    """
    if 2 * hw * c * itemsize <= budget_bytes:
        return hw
    t = budget_bytes // (2 * c * itemsize)
    t = max(128, (t // 128) * 128)
    return min(t, hw)


def channel_attention(x, w_fc1, w_fc2, *, input_vmem_budget=12 << 20):
    """x: NCHW (f32 or bf16).  w_fc1: [C/r, C, 1, 1], w_fc2: [C, C/r, 1, 1].

    Returns the channel attention map with shape (B, C, 1, 1), dtype of x,
    matching ChannelAttention.forward.
    """
    b, c, h, w = x.shape
    cr = w_fc1.shape[0]
    hw = h * w

    # Free views — no data movement in the wrapper.
    xf = x.reshape(b, c, hw)                           # channels on sublanes
    w1 = w_fc1.reshape(cr, c).astype(jnp.float32)      # left-multiply as-is
    w2 = w_fc2.reshape(c, cr).astype(jnp.float32)

    tile = _pick_spatial_tile(hw, c, xf.dtype.itemsize, input_vmem_budget)
    n_steps = pl.cdiv(hw, tile)
    needs_mask = (hw % tile) != 0

    kern = functools.partial(_channel_attention_kernel,
                             inv_hw=1.0 / float(hw), hw=hw,
                             slope=LEAKY_SLOPE, needs_mask=needs_mask)

    # Explicit scoped-VMEM limit: double-buffered x tile + double-buffered
    # weights + small scratch, with margin (>= 32 MiB is harmless everywhere).
    x_bytes = 2 * c * tile * xf.dtype.itemsize
    w_bytes = 2 * 2 * c * cr * 4
    vmem_limit = max(32 << 20, int(1.5 * (x_bytes + w_bytes)))

    out = pl.pallas_call(
        kern,
        out_shape=jax.ShapeDtypeStruct((b, c, 1), x.dtype),
        grid_spec=pltpu.PrefetchScalarGridSpec(
            num_scalar_prefetch=0,
            grid=(b, n_steps),
            in_specs=[
                pl.BlockSpec((1, c, tile), lambda i, s: (i, 0, s)),
                pl.BlockSpec((cr, c), lambda i, s: (0, 0)),
                pl.BlockSpec((c, cr), lambda i, s: (0, 0)),
            ],
            out_specs=pl.BlockSpec((1, c, 1), lambda i, s: (i, 0, 0)),
            scratch_shapes=[pltpu.VMEM((c, 1), jnp.float32),
                            pltpu.VMEM((c, 1), jnp.float32)],
        ),
        compiler_params=pltpu.CompilerParams(
            dimension_semantics=("parallel", "arbitrary"),
            vmem_limit_bytes=vmem_limit),
    )(xf, w1, w2)

    return out.reshape(b, c, 1, 1)


# --------------------------------------------------------------------------
# Pure-JAX reference (matches the PyTorch module semantics).
# --------------------------------------------------------------------------
def channel_attention_ref(x, w_fc1, w_fc2):
    b, c, h, w = x.shape
    cr = w_fc1.shape[0]
    w1 = w_fc1.reshape(cr, c).astype(jnp.float32)
    w2 = w_fc2.reshape(c, cr).astype(jnp.float32)

    def branch(p):  # p: (B, C)
        h1 = p @ w1.T
        h1 = jnp.where(h1 >= 0.0, h1, LEAKY_SLOPE * h1)
        return h1 @ w2.T

    xf = x.astype(jnp.float32)
    avg = jnp.mean(xf, axis=(2, 3))
    mx = jnp.max(xf, axis=(2, 3))
    out = jax.nn.sigmoid(branch(avg) + branch(mx))
    return out.reshape(b, c, 1, 1)


# --------------------------------------------------------------------------
# Deterministic synthetic parameters (shapes follow the module's __init__).
# --------------------------------------------------------------------------
def make_params(key, in_planes, ratio=8):
    k1, k2 = jax.random.split(key)
    cr = in_planes // ratio

    def conv_w(k, cout, cin):
        bound = 1.0 / jnp.sqrt(float(cin))  # 1x1 conv fan_in = cin
        return jax.random.uniform(k, (cout, cin, 1, 1), jnp.float32, -bound, bound)

    return dict(fc1=conv_w(k1, cr, in_planes), fc2=conv_w(k2, in_planes, cr))


if __name__ == "__main__":
    key = jax.random.PRNGKey(0)
    kx, kp, kx2, kp2 = jax.random.split(key, 4)

    # ---- main case: in_planes=64, ratio=8 -> hidden=8 -------------------
    B, C, H, W = 2, 64, 16, 16
    x = jax.random.normal(kx, (B, C, H, W), jnp.float32)
    params = make_params(kp, C, ratio=8)

    out = channel_attention(x, params["fc1"], params["fc2"])
    out = jax.block_until_ready(out)
    ref = channel_attention_ref(x, params["fc1"], params["fc2"])
    assert out.shape == (B, C, 1, 1), out.shape
    assert bool(jnp.all(jnp.isfinite(out)))
    assert bool(jnp.allclose(out, ref, rtol=1e-5, atol=1e-5)), (
        float(jnp.max(jnp.abs(out - ref))))

    # ---- second case: forces multi-step grid + ragged masked last tile --
    B2, C2, H2, W2 = 1, 16, 16, 17          # hw=272 -> tiles of 128, ragged tail
    x2 = jax.random.normal(kx2, (B2, C2, H2, W2), jnp.float32)
    params2 = make_params(kp2, C2, ratio=8)
    out2 = channel_attention(x2, params2["fc1"], params2["fc2"],
                             input_vmem_budget=16 << 10)   # tiny budget -> tiling path
    out2 = jax.block_until_ready(out2)
    ref2 = channel_attention_ref(x2, params2["fc1"], params2["fc2"])
    assert out2.shape == (B2, C2, 1, 1), out2.shape
    assert bool(jnp.allclose(out2, ref2, rtol=1e-5, atol=1e-5)), (
        float(jnp.max(jnp.abs(out2 - ref2))))

    print("KERNEL_OK")
</pallas_src>

<mosaic_0001>
module attributes {stable_mosaic.version = 11 : i64} {
  func.func @_channel_attention_kernel(%arg0: i32, %arg1: i32, %arg2: memref<1x64x256xf32, #tpu.memory_space<vmem>>, %arg3: memref<8x64xf32, #tpu.memory_space<vmem>>, %arg4: memref<64x8xf32, #tpu.memory_space<vmem>>, %arg5: memref<1x64x1xf32, #tpu.memory_space<vmem>>, %arg6: memref<64x1xf32, #tpu.memory_space<vmem>>, %arg7: memref<64x1xf32, #tpu.memory_space<vmem>>) attributes {dimension_semantics = [#tpu.dimension_semantics<parallel>, #tpu.dimension_semantics<arbitrary>], iteration_bounds = array<i64: 2, 1>, scalar_prefetch = 0 : i64, scratch_operands = 2 : i64, tpu.core_type = #tpu.core_type<tc>, window_params = [{transform_indices = @transform_0, window_bounds = array<i64: 1, 64, 256>}, {pipeline_mode = #tpu.pipeline_mode<synchronous>, transform_indices = @transform_1, window_bounds = array<i64: 8, 64>}, {pipeline_mode = #tpu.pipeline_mode<synchronous>, transform_indices = @transform_2, window_bounds = array<i64: 64, 8>}, {transform_indices = @transform_3, window_bounds = array<i64: 1, 64, 1>}]} {
    %c0_i32 = arith.constant 0 : i32
    %0 = arith.cmpi eq, %arg1, %c0_i32 : i32
    %1 = arith.extui %0 : i1 to i32
    %c0_i32_0 = arith.constant 0 : i32
    %2 = arith.cmpi ne, %1, %c0_i32_0 : i32
    scf.if %2 {
      %cst_14 = arith.constant 0.000000e+00 : f32
      %18 = vector.broadcast %cst_14 : f32 to vector<64x1xf32>
      %c0_15 = arith.constant 0 : index
      %c0_16 = arith.constant 0 : index
      %19 = vector.load %arg6[%c0_15, %c0_16] : memref<64x1xf32, #tpu.memory_space<vmem>>, vector<64x1xf32>
      tpu.vector_store %arg6[%c0_15, %c0_16], %18 {strides = array<i32>} : memref<64x1xf32, #tpu.memory_space<vmem>>, vector<64x1xf32>,
      %cst_17 = arith.constant 0xFF800000 : f32
      %20 = vector.broadcast %cst_17 : f32 to vector<64x1xf32>
      %c0_18 = arith.constant 0 : index
      %c0_19 = arith.constant 0 : index
      %21 = vector.load %arg7[%c0_18, %c0_19] : memref<64x1xf32, #tpu.memory_space<vmem>>, vector<64x1xf32>
      tpu.vector_store %arg7[%c0_18, %c0_19], %20 {strides = array<i32>} : memref<64x1xf32, #tpu.memory_space<vmem>>, vector<64x1xf32>,
    } else {
    }
    %c0 = arith.constant 0 : index
    %c0_1 = arith.constant 0 : index
    %c0_2 = arith.constant 0 : index
    %3 = vector.load %arg2[%c0, %c0_1, %c0_2] : memref<1x64x256xf32, #tpu.memory_space<vmem>>, vector<1x64x256xf32>
    %4 = vector.shape_cast %3 : vector<1x64x256xf32> to vector<64x256xf32>
    %c0_3 = arith.constant 0 : index
    %c0_4 = arith.constant 0 : index
    %5 = vector.load %arg6[%c0_3, %c0_4] : memref<64x1xf32, #tpu.memory_space<vmem>>, vector<64x1xf32>
    %cst = arith.constant dense<0.000000e+00> : vector<64xf32>
    %6 = vector.multi_reduction <add>, %4, %cst [1] : vector<64x256xf32> to vector<64xf32>
    %7 = vector.shape_cast %6 : vector<64xf32> to vector<64x1xf32>
    %8 = arith.addf %5, %7 : vector<64x1xf32>
    %c0_5 = arith.constant 0 : index
    %c0_6 = arith.constant 0 : index
    %9 = vector.load %arg6[%c0_5, %c0_6] : memref<64x1xf32, #tpu.memory_space<vmem>>, vector<64x1xf32>
    tpu.vector_store %arg6[%c0_5, %c0_6], %8 {strides = array<i32>} : memref<64x1xf32, #tpu.memory_space<vmem>>, vector<64x1xf32>,
    %c0_7 = arith.constant 0 : index
    %c0_8 = arith.constant 0 : index
    %10 = vector.load %arg7[%c0_7, %c0_8] : memref<64x1xf32, #tpu.memory_space<vmem>>, vector<64x1xf32>
    %cst_9 = arith.constant dense<0xFF800000> : vector<64xf32>
    %11 = vector.multi_reduction <maximumf>, %4, %cst_9 [1] : vector<64x256xf32> to vector<64xf32>
    %12 = vector.shape_cast %11 : vector<64xf32> to vector<64x1xf32>
    %13 = arith.maximumf %10, %12 : vector<64x1xf32>
    %c0_10 = arith.constant 0 : index
    %c0_11 = arith.constant 0 : index
    %14 = vector.load %arg7[%c0_10, %c0_11] : memref<64x1xf32, #tpu.memory_space<vmem>>, vector<64x1xf32>
    tpu.vector_store %arg7[%c0_10, %c0_11], %13 {strides = array<i32>} : memref<64x1xf32, #tpu.memory_space<vmem>>, vector<64x1xf32>,
    %c0_i32_12 = arith.constant 0 : i32
    %15 = arith.cmpi eq, %arg1, %c0_i32_12 : i32
    %16 = arith.extui %15 : i1 to i32
    %c0_i32_13 = arith.constant 0 : i32
    %17 = arith.cmpi ne, %16, %c0_i32_13 : i32
    scf.if %17 {
      %c0_14 = arith.constant 0 : index
      %c0_15 = arith.constant 0 : index
      %18 = vector.load %arg6[%c0_14, %c0_15] : memref<64x1xf32, #tpu.memory_space<vmem>>, vector<64x1xf32>
      %cst_16 = arith.constant 3.906250e-03 : f32
      %19 = vector.broadcast %cst_16 : f32 to vector<64x1xf32>
      %20 = arith.mulf %18, %19 : vector<64x1xf32>
      %c0_17 = arith.constant 0 : index
      %c0_18 = arith.constant 0 : index
      %21 = vector.load %arg7[%c0_17, %c0_18] : memref<64x1xf32, #tpu.memory_space<vmem>>, vector<64x1xf32>
      %22 = tpu.concatenate %20, %21 in 1 : vector<64x1xf32>, vector<64x1xf32> -> vector<64x2xf32>
      %c0_19 = arith.constant 0 : index
      %c0_20 = arith.constant 0 : index
      %23 = vector.load %arg3[%c0_19, %c0_20] : memref<8x64xf32, #tpu.memory_space<vmem>>, vector<8x64xf32>
      %cst_21 = arith.constant dense<0.000000e+00> : vector<8x2xf32>
      %24 = tpu.matmul %23, %22, %cst_21 {dimension_numbers = #tpu.dot_dimension_numbers<[1], [0], [0], [1], [0, 0, 1, 1], [], []>} : vector<8x64xf32>, vector<64x2xf32>, vector<8x2xf32> -> vector<8x2xf32>
      %cst_22 = arith.constant 0.000000e+00 : f32
      %25 = vector.broadcast %cst_22 : f32 to vector<8x2xf32>
      %26 = arith.cmpf oge, %24, %25 : vector<8x2xf32>
      %cst_23 = arith.constant 0.00999999977 : f32
      %27 = vector.broadcast %cst_23 : f32 to vector<8x2xf32>
      %28 = arith.mulf %27, %24 : vector<8x2xf32>
      %29 = arith.select %26, %24, %28 : vector<8x2xi1>, vector<8x2xf32>
      %c0_24 = arith.constant 0 : index
      %c0_25 = arith.constant 0 : index
      %30 = vector.load %arg4[%c0_24, %c0_25] : memref<64x8xf32, #tpu.memory_space<vmem>>, vector<64x8xf32>
      %cst_26 = arith.constant dense<0.000000e+00> : vector<64x2xf32>
      %31 = tpu.matmul %30, %29, %cst_26 {dimension_numbers = #tpu.dot_dimension_numbers<[1], [0], [0], [1], [0, 0, 1, 1], [], []>} : vector<64x8xf32>, vector<8x2xf32>, vector<64x2xf32> -> vector<64x2xf32>
      %32 = vector.extract_strided_slice %31 {offsets = [0, 0], sizes = [64, 1], strides = [1, 1]} : vector<64x2xf32> to vector<64x1xf32>
      %33 = vector.extract_strided_slice %31 {offsets = [0, 1], sizes = [64, 1], strides = [1, 1]} : vector<64x2xf32> to vector<64x1xf32>
      %34 = arith.addf %32, %33 : vector<64x1xf32>
      %cst_27 = arith.constant 0.000000e+00 : f32
      %35 = vector.broadcast %cst_27 : f32 to vector<64x1xf32>
      %36 = arith.subf %35, %34 : vector<64x1xf32>
      %37 = math.exp %36 : vector<64x1xf32>
      %cst_28 = arith.constant 1.000000e+00 : f32
      %38 = vector.broadcast %cst_28 : f32 to vector<64x1xf32>
      %39 = arith.addf %38, %37 : vector<64x1xf32>
      %cst_29 = arith.constant 1.000000e+00 : f32
      %40 = vector.broadcast %cst_29 : f32 to vector<64x1xf32>
      %41 = arith.divf %40, %39 : vector<64x1xf32>
      %c0_30 = arith.constant 0 : index
      %c0_31 = arith.constant 0 : index
      %c0_32 = arith.constant 0 : index
      %42 = vector.load %arg5[%c0_30, %c0_31, %c0_32] : memref<1x64x1xf32, #tpu.memory_space<vmem>>, vector<1x64x1xf32>
      %43 = vector.shape_cast %42 : vector<1x64x1xf32> to vector<64x1xf32>
      %44 = vector.shape_cast %41 : vector<64x1xf32> to vector<1x64x1xf32>
      tpu.vector_store %arg5[%c0_30, %c0_31, %c0_32], %44 {strides = array<i32>} : memref<1x64x1xf32, #tpu.memory_space<vmem>>, vector<1x64x1xf32>,
    } else {
    }
    return
  }
  func.func @transform_0(%arg0: i32, %arg1: i32) -> (i32, i32, i32) {
    %c0_i32 = arith.constant 0 : i32
    %c0_i32_0 = arith.constant 0 : i32
    return %arg0, %c0_i32, %arg1 : i32, i32, i32
  }
  func.func @transform_1(%arg0: i32, %arg1: i32) -> (i32, i32) {
    %c0_i32 = arith.constant 0 : i32
    %c0_i32_0 = arith.constant 0 : i32
    %c0_i32_1 = arith.constant 0 : i32
    return %c0_i32, %c0_i32_0 : i32, i32
  }
  func.func @transform_2(%arg0: i32, %arg1: i32) -> (i32, i32) {
    %c0_i32 = arith.constant 0 : i32
    %c0_i32_0 = arith.constant 0 : i32
    %c0_i32_1 = arith.constant 0 : i32
    return %c0_i32, %c0_i32_0 : i32, i32
  }
  func.func @transform_3(%arg0: i32, %arg1: i32) -> (i32, i32, i32) {
    %c0_i32 = arith.constant 0 : i32
    %c0_i32_0 = arith.constant 0 : i32
    %c0_i32_1 = arith.constant 0 : i32
    return %arg0, %c0_i32, %c0_i32_0 : i32, i32, i32
  }
}

</mosaic_0001>

<llo_original>
// kernel: tpu_custom_call.1
$region0: #{tpu_custom_call.1}
  #allocation0 [shape = 'u32[]', space=smem, size = 0x4, offset = 0x4, fixed_abs, tag = 'smem constant byte address 0x4 - core index']
  #allocation1 [shape = 'u32[144,128]{1,0:T(1,128)}', space=vmem, size = 0x12000, scoped, tag = 'internal scratch']
  #allocation2 [shape = 'f32[64,1]{1,0:T(8,128)}', space=vmem, size = 0x8000, scoped, tag = 'scratch operand']
  #allocation3 [shape = 'f32[64,1]{1,0:T(8,128)}', space=vmem, size = 0x8000, scoped, tag = 'scratch operand']
  %s0 = inlined_call_operand.hbm [shape: f32[2,64,256], index: 0, kind: input, shape index: {}]
  %s1 = inlined_call_operand.vmem [shape: f32[8,64], index: 1, kind: input, shape index: {}]
  %s2 = inlined_call_operand.vmem [shape: f32[64,8], index: 2, kind: input, shape index: {}]
  %s3 = inlined_call_operand.vmem [shape: f32[2,64,1], index: 3, kind: output, shape index: {}]
  %s4 = sld [smem:[#allocation0]]
  $region57: #{tpu_custom_call.1} parent=0
    _
  %s6 = ssub.s32 1, %s4
  %s7 = scalar_select 0, %s6, %s4
  $region1: #{tpu_custom_call.1} parent=0
    #allocation4 [shape = 'u8[131072]{0}', space=vmem, size = 0x20000, scoped, tag = 'input window, operand 0']
    #allocation5 [shape = 's32[2]{0}', space=sflag, size = 0x8, scoped, tag = 'scoped memory for tpu_custom_call.1']
    %8 = vsyncpa [#allocation5], 0
    %s9 = scalar_lea.sflag [#allocation5], 1
    %10 = vsyncpa %s9, 0
    loop: start=0, step=1, limit=4
    $region2: #{tpu_custom_call.1} parent=1 // loop_pre_header
      _
    $region3: #{tpu_custom_call.1} parent=1 // loop_header
      %s12 = sphi 0, %s16
      %p13 = scmp.ge.s32.totalorder %s12, 4
      %s19 = sphi 0, %s31
      %s20 = sphi 0, %s27
      %s21 = sphi 0, %s19
      %s22 = sphi 0, %s20
      %s23 = sphi 0, %s21
      %s24 = sphi 0, %s22
      %s36 = sphi 0, %s38
      %s39 = sphi 0, %s36
      %s40 = sphi 0, %s39
      %s56 = sphi 0, %s40
      %s60 = sphi 0, %s60
      %s62 = sphi 0, %s60
      %s63 = sphi 0, %s62
      %s77 = sphi 0, %s63
      %s81 = sphi 0, %s81
      %s83 = sphi 0, %s81
      %s84 = sphi 0, %s83
      %s98 = sphi 0, %s84
      %s104 = sphi 0, %s106
      %s107 = sphi 0, %s104
      %s108 = sphi 0, %s107
      %s124 = sphi 0, %s108
    $region4: #{tpu_custom_call.1} parent=1 // loop_header_branch
      %15 = sbr.rel (%p13) target = $region8
    $region5: #{tpu_custom_call.1} parent=1 // loop_body
      %s17 = ssub.s32 %s12, 1
      %s18 = ssub.s32 %s12, 2
      %s25 = sadd.s32 1, %s20
      %p26 = scmp.ge.s32.totalorder %s25, 1
      %s27 = scalar_select %p26, 0, %s25
      %s28 = sadd.s32 1, %s19
      %s29 = scalar_select %p26, %s28, %s19
      %p30 = scmp.ge.s32.totalorder %s29, 2
      %s31 = scalar_select %p30, 0, %s29
      %s32 = ssub.s32 %s19, %s31
      %s33 = ssub.s32 %s20, %s27
      %s34 = sor.u32 %s32, %s33
      %p35 = scmp.eq.s32.totalorder %s34, 0
      %s37 = sadd.s32 %s36, 1
      %s38 = scalar_select %p35, %s36, %s37
      %p41 = pneg %p35
      %p42 = scmp.eq.s32.totalorder %s12, 1
      %p43 = por %p41, %p42
      %p44 = scmp.ne.s32.totalorder %s36, %s39
      %p45 = scmp.eq.s32.totalorder %s12, 0
      %p46 = por %p44, %p45
      %p47 = scmp.ne.s32.totalorder %s36, %s39
      %p48 = scmp.eq.s32.totalorder %s17, 1
      %p49 = por %p47, %p48
      %p50 = scmp.ne.s32.totalorder %s39, %s40
      %p51 = scmp.eq.s32.totalorder %s17, 0
      %p52 = por %p50, %p51
      %p53 = scmp.ne.s32.totalorder %s39, %s40
      %p54 = scmp.eq.s32.totalorder %s18, 1
      %p55 = por %p53, %p54
      %p57 = scmp.ne.s32.totalorder %s40, %s56
      %p58 = scmp.eq.s32.totalorder %s18, 0
      %p59 = por %p57, %p58
      %s61 = sadd.s32 %s60, 1
      %p64 = scmp.eq.s32.totalorder %s12, 1
      %p65 = scmp.ne.s32.totalorder %s60, %s62
      %p66 = scmp.eq.s32.totalorder %s12, 0
      %p67 = por %p65, %p66
      %p68 = scmp.ne.s32.totalorder %s60, %s62
      %p69 = scmp.eq.s32.totalorder %s17, 1
      %p70 = por %p68, %p69
      %p71 = scmp.ne.s32.totalorder %s62, %s63
      %p72 = scmp.eq.s32.totalorder %s17, 0
      %p73 = por %p71, %p72
      %p74 = scmp.ne.s32.totalorder %s62, %s63
      %p75 = scmp.eq.s32.totalorder %s18, 1
      %p76 = por %p74, %p75
      %p78 = scmp.ne.s32.totalorder %s63, %s77
      %p79 = scmp.eq.s32.totalorder %s18, 0
      %p80 = por %p78, %p79
      %s82 = sadd.s32 %s81, 1
      %p85 = scmp.eq.s32.totalorder %s12, 1
      %p86 = scmp.ne.s32.totalorder %s81, %s83
      %p87 = scmp.eq.s32.totalorder %s12, 0
      %p88 = por %p86, %p87
      %p89 = scmp.ne.s32.totalorder %s81, %s83
      %p90 = scmp.eq.s32.totalorder %s17, 1
      %p91 = por %p89, %p90
      %p92 = scmp.ne.s32.totalorder %s83, %s84
      %p93 = scmp.eq.s32.totalorder %s17, 0
      %p94 = por %p92, %p93
      %p95 = scmp.ne.s32.totalorder %s83, %s84
      %p96 = scmp.eq.s32.totalorder %s18, 1
      %p97 = por %p95, %p96
      %p99 = scmp.ne.s32.totalorder %s84, %s98
      %p100 = scmp.eq.s32.totalorder %s18, 0
      %p101 = por %p99, %p100
      %s102 = ssub.s32 %s19, %s31
      %p103 = scmp.eq.s32.totalorder %s102, 0
      %s105 = sadd.s32 %s104, 1
      %s106 = scalar_select %p103, %s104, %s105
      %p109 = pneg %p103
      %p110 = scmp.eq.s32.totalorder %s12, 1
      %p111 = por %p109, %p110
      %p112 = scmp.ne.s32.totalorder %s104, %s107
      %p113 = scmp.eq.s32.totalorder %s12, 0
      %p114 = por %p112, %p113
      %p115 = scmp.ne.s32.totalorder %s104, %s107
      %p116 = scmp.eq.s32.totalorder %s17, 1
      %p117 = por %p115, %p116
      %p118 = scmp.ne.s32.totalorder %s107, %s108
      %p119 = scmp.eq.s32.totalorder %s17, 0
      %p120 = por %p118, %p119
      %p121 = scmp.ne.s32.totalorder %s107, %s108
      %p122 = scmp.eq.s32.totalorder %s18, 1
      %p123 = por %p121, %p122
      %p125 = scmp.ne.s32.totalorder %s108, %s124
      %p126 = scmp.eq.s32.totalorder %s18, 0
      %p127 = por %p125, %p126
      %p128 = scmp.le.s32.totalorder 1, %s12
      %p129 = scmp.lt.s32.totalorder %s12, 3
      %p130 = pnand %p128, %p129
      %p131 = pneg %p130
      // Predicated region
      $region9: #{tpu_custom_call.1} parent=5 // pred_check
        _
      $region10: #{tpu_custom_call.1} parent=5 // pred_check_branch
        %133 = sbr.rel (%p130) target = $region12
      $region11: #{tpu_custom_call.1} parent=5 // pred_region
        %s134 = ssub.s32 %s12, 1
        // Predicated region
        $region13: #{tpu_custom_call.1} parent=11 // pred_check
          %p135 = pneg %p73
        $region14: #{tpu_custom_call.1} parent=11 // pred_check_branch
          %137 = sbr.rel (%p135) target = $region16
        $region15: #{tpu_custom_call.1} parent=11 // pred_region
          _
        $region16: #{tpu_custom_call.1} parent=11 // pred_fallthru
          _
        // Predicated region
        $region17: #{tpu_custom_call.1} parent=11 // pred_check
          %p138 = pneg %p94
        $region18: #{tpu_custom_call.1} parent=11 // pred_check_branch
          %140 = sbr.rel (%p138) target = $region20
        $region19: #{tpu_custom_call.1} parent=11 // pred_region
          _
        $region20: #{tpu_custom_call.1} parent=11 // pred_fallthru
          _
      $region12: #{tpu_custom_call.1} parent=5 // pred_fallthru
        _
      %p141 = scmp.lt.s32.totalorder %s12, 2
      // Predicated region
      $region21: #{tpu_custom_call.1} parent=5 // pred_check
        %p142 = pneg %p141
      $region22: #{tpu_custom_call.1} parent=5 // pred_check_branch
        %144 = sbr.rel (%p142) target = $region24
      $region23: #{tpu_custom_call.1} parent=5 // pred_region
        // Predicated region
        $region25: #{tpu_custom_call.1} parent=23 // pred_check
          %p145 = pneg %p46
        $region26: #{tpu_custom_call.1} parent=23 // pred_check_branch
          %147 = sbr.rel (%p145) target = $region28
        $region27: #{tpu_custom_call.1} parent=23 // pred_region
          %s148 = sand.u32 %s36, 1
          %s149 = scalar_lea.sflag [#allocation5], %s148
          %s150 = sand.u32 %s36, 1
          %s151 = smul.addr %s150, 128
          %s152 = scalar_lea.vmem [#allocation4], %s151
          %s153 = smul.u32 2, %s20
          %s155 = ssub.s32 2048, 2048
          %156 = vsyncadd %s149, %s155
          %s157 = smul.addr %s19, 16
          %s158 = sadd.s32 %s153, %s157
          %s159 = smul.addr %s158, 128
          %s160 = scalar_lea.hbm %s0, %s159
          %s161 = sshll.u32 %s152, 4
          %s162 = int_to_ptr.vmem [resolvable:$true] %s161
          %167 = dma.hbm_to_vmem [thread:$0]  %s160, 2048, %s162, %s149, 256, 256, 16
        $region28: #{tpu_custom_call.1} parent=23 // pred_fallthru
          _
      $region24: #{tpu_custom_call.1} parent=5 // pred_fallthru
        _
      %p168 = scmp.le.s32.totalorder 1, %s12
      %p169 = scmp.lt.s32.totalorder %s12, 3
      %p170 = pnand %p168, %p169
      %p171 = pneg %p170
      // Predicated region
      $region29: #{tpu_custom_call.1} parent=5 // pred_check
        _
      $region30: #{tpu_custom_call.1} parent=5 // pred_check_branch
        %173 = sbr.rel (%p170) target = $region32
      $region31: #{tpu_custom_call.1} parent=5 // pred_region
        %s174 = ssub.s32 %s12, 1
        %s175 = sand.u32 %s39, 1
        %s176 = scalar_lea.sflag [#allocation5], %s175
        %s177 = sand.u32 %s39, 1
        %s178 = smul.addr %s177, 128
        %s179 = scalar_lea.vmem [#allocation4], %s178
        // Predicated region
        $region33: #{tpu_custom_call.1} parent=31 // pred_check
          %p180 = pneg %p52
        $region34: #{tpu_custom_call.1} parent=31 // pred_check_branch
          %182 = sbr.rel (%p180) target = $region36
        $region35: #{tpu_custom_call.1} parent=31 // pred_region
          %183 = dma.done %s176, 2048
        $region36: #{tpu_custom_call.1} parent=31 // pred_fallthru
          _
        %s184 = sand.u32 %s39, 1
        %s185 = scalar_lea.sflag [#allocation5], %s184
        %s186 = sand.u32 %s39, 1
        %s187 = smul.addr %s186, 128
        %s188 = scalar_lea.vmem [#allocation4], %s187
        %p189 = pneg %p52
        %p190 = pneg %p49
        %p191 = pneg %p73
        %p192 = pneg %p70
        %p193 = pneg %p94
        %p194 = pneg %p91
        %p195 = pneg %p120
        %p196 = pneg %p117
        %p197 = scmp.lt.s32.totalorder %s21, 1
        %s198 = scalar_select %p197, %s21, 1
        %s199 = smul.addr %s198, 8
        %s200 = smul.addr %s199, 8
        %s201 = scalar_lea.vmem %s3, %s200
        %s202 = smul.u32 2, %s22
        %p203 = scmp.lt.s32.totalorder %s21, 1
        %s204 = scalar_select %p203, %s21, 1
        %s205 = smul.addr %s204, 8
        %s206 = smul.addr %s205, 8
        %s207 = scalar_lea.vmem %s3, %s206
        %p208 = scmp.eq.s32.totalorder %s22, 0
        // Predicated region
        $region37: #{tpu_custom_call.1} parent=31 // pred_check
          %p209 = pneg %p208
        $region38: #{tpu_custom_call.1} parent=31 // pred_check_branch
          %211 = sbr.rel (%p209) target = $region40
        $region39: #{tpu_custom_call.1} parent=31 // pred_region
          %vm212 = vcmask 7168
          %213 = vst.msk [vmem:[#allocation2] sm:$0xff] %vm212, 0.0
          %214 = vst.msk [vmem:[#allocation2 + $0x8] sm:$0xff] %vm212, 0.0
          %215 = vst.msk [vmem:[#allocation2 + $0x10] sm:$0xff] %vm212, 0.0
          %216 = vst.msk [vmem:[#allocation2 + $0x18] sm:$0xff] %vm212, 0.0
          %217 = vst.msk [vmem:[#allocation2 + $0x20] sm:$0xff] %vm212, 0.0
          %218 = vst.msk [vmem:[#allocation2 + $0x28] sm:$0xff] %vm212, 0.0
          %219 = vst.msk [vmem:[#allocation2 + $0x30] sm:$0xff] %vm212, 0.0
          %220 = vst.msk [vmem:[#allocation2 + $0x38] sm:$0xff] %vm212, 0.0
          %221 = vst.msk [vmem:[#allocation3] sm:$0xff] %vm212, -inf
          %222 = vst.msk [vmem:[#allocation3 + $0x8] sm:$0xff] %vm212, -inf
          %223 = vst.msk [vmem:[#allocation3 + $0x10] sm:$0xff] %vm212, -inf
          %224 = vst.msk [vmem:[#allocation3 + $0x18] sm:$0xff] %vm212, -inf
          %225 = vst.msk [vmem:[#allocation3 + $0x20] sm:$0xff] %vm212, -inf
          %226 = vst.msk [vmem:[#allocation3 + $0x28] sm:$0xff] %vm212, -inf
          %227 = vst.msk [vmem:[#allocation3 + $0x30] sm:$0xff] %vm212, -inf
          %228 = vst.msk [vmem:[#allocation3 + $0x38] sm:$0xff] %vm212, -inf
        $region40: #{tpu_custom_call.1} parent=31 // pred_fallthru
          _
        %v229 = vld [vmem:[%s179] sm:$0xff]
        %v230 = vld [vmem:[%s179 + $0x8] sm:$0xff]
        %v231 = vld [vmem:[%s179 + $0x10] sm:$0xff]
        %v232 = vld [vmem:[%s179 + $0x18] sm:$0xff]
        %v233 = vld [vmem:[%s179 + $0x20] sm:$0xff]
        %v234 = vld [vmem:[%s179 + $0x28] sm:$0xff]
        %v235 = vld [vmem:[%s179 + $0x30] sm:$0xff]
        %v236 = vld [vmem:[%s179 + $0x38] sm:$0xff]
        %v237 = vld [vmem:[%s179 + $0x40] sm:$0xff]
        %v238 = vld [vmem:[%s179 + $0x48] sm:$0xff]
        %v239 = vld [vmem:[%s179 + $0x50] sm:$0xff]
        %v240 = vld [vmem:[%s179 + $0x58] sm:$0xff]
        %v241 = vld [vmem:[%s179 + $0x60] sm:$0xff]
        %v242 = vld [vmem:[%s179 + $0x68] sm:$0xff]
        %v243 = vld [vmem:[%s179 + $0x70] sm:$0xff]
        %v244 = vld [vmem:[%s179 + $0x78] sm:$0xff]
        %v245 = vld [vmem:[#allocation2] sm:$0xff]
        %v246 = vld [vmem:[#allocation2 + $0x8] sm:$0xff]
        %v247 = vld [vmem:[#allocation2 + $0x10] sm:$0xff]
        %v248 = vld [vmem:[#allocation2 + $0x18] sm:$0xff]
        %v249 = vld [vmem:[#allocation2 + $0x20] sm:$0xff]
        %v250 = vld [vmem:[#allocation2 + $0x28] sm:$0xff]
        %v251 = vld [vmem:[#allocation2 + $0x30] sm:$0xff]
        %v252 = vld [vmem:[#allocation2 + $0x38] sm:$0xff]
        %v253 = vadd.f32 %v229, %v230
        %254 = vadd.xlane.f32.xlu0 %v253
        %v255 = vpop.xlane.xlu0 %254
        %v256 = vadd.f32 %v231, %v232
        %257 = vadd.xlane.f32.xlu0 %v256
        %v258 = vpop.xlane.xlu0 %257
        %v259 = vadd.f32 %v233, %v234
        %260 = vadd.xlane.f32.xlu0 %v259
        %v261 = vpop.xlane.xlu0 %260
        %v262 = vadd.f32 %v235, %v236
        %263 = vadd.xlane.f32.xlu0 %v262
        %v264 = vpop.xlane.xlu0 %263
        %v265 = vadd.f32 %v237, %v238
        %266 = vadd.xlane.f32.xlu0 %v265
        %v267 = vpop.xlane.xlu0 %266
        %v268 = vadd.f32 %v239, %v240
        %269 = vadd.xlane.f32.xlu0 %v268
        %v270 = vpop.xlane.xlu0 %269
        %v271 = vadd.f32 %v241, %v242
        %272 = vadd.xlane.f32.xlu0 %v271
        %v273 = vpop.xlane.xlu0 %272
        %v274 = vadd.f32 %v243, %v244
        %275 = vadd.xlane.f32.xlu0 %v274
        %v276 = vpop.xlane.xlu0 %275
        %v277 = vadd.f32 %v245, %v255
        %v278 = vadd.f32 %v246, %v258
        %v279 = vadd.f32 %v247, %v261
        %v280 = vadd.f32 %v248, %v264
        %v281 = vadd.f32 %v249, %v267
        %v282 = vadd.f32 %v250, %v270
        %v283 = vadd.f32 %v251, %v273
        %v284 = vadd.f32 %v252, %v276
        %vm285 = vcmask 7168
        %286 = vst.msk [vmem:[#allocation2] sm:$0xff] %vm285, %v277
        %287 = vst.msk [vmem:[#allocation2 + $0x8] sm:$0xff] %vm285, %v278
        %288 = vst.msk [vmem:[#allocation2 + $0x10] sm:$0xff] %vm285, %v279
        %289 = vst.msk [vmem:[#allocation2 + $0x18] sm:$0xff] %vm285, %v280
        %290 = vst.msk [vmem:[#allocation2 + $0x20] sm:$0xff] %vm285, %v281
        %291 = vst.msk [vmem:[#allocation2 + $0x28] sm:$0xff] %vm285, %v282
        %292 = vst.msk [vmem:[#allocation2 + $0x30] sm:$0xff] %vm285, %v283
        %293 = vst.msk [vmem:[#allocation2 + $0x38] sm:$0xff] %vm285, %v284
        %v294 = vld [vmem:[#allocation3] sm:$0xff]
        %v295 = vld [vmem:[#allocation3 + $0x8] sm:$0xff]
        %v296 = vld [vmem:[#allocation3 + $0x10] sm:$0xff]
        %v297 = vld [vmem:[#allocation3 + $0x18] sm:$0xff]
        %v298 = vld [vmem:[#allocation3 + $0x20] sm:$0xff]
        %v299 = vld [vmem:[#allocation3 + $0x28] sm:$0xff]
        %v300 = vld [vmem:[#allocation3 + $0x30] sm:$0xff]
        %v301 = vld [vmem:[#allocation3 + $0x38] sm:$0xff]
        %v302 = vmax.f32 %v229, %v230
        %303 = vmax.xlane.f32.xlu0 %v302
        %v304 = vpop.xlane.xlu0 %303
        %v305 = vmax.f32 %v231, %v232
        %306 = vmax.xlane.f32.xlu0 %v305
        %v307 = vpop.xlane.xlu0 %306
        %v308 = vmax.f32 %v233, %v234
        %309 = vmax.xlane.f32.xlu0 %v308
        %v310 = vpop.xlane.xlu0 %309
        %v311 = vmax.f32 %v235, %v236
        %312 = vmax.xlane.f32.xlu0 %v311
        %v313 = vpop.xlane.xlu0 %312
        %v314 = vmax.f32 %v237, %v238
        %315 = vmax.xlane.f32.xlu0 %v314
        %v316 = vpop.xlane.xlu0 %315
        %v317 = vmax.f32 %v239, %v240
        %318 = vmax.xlane.f32.xlu0 %v317
        %v319 = vpop.xlane.xlu0 %318
        %v320 = vmax.f32 %v241, %v242
        %321 = vmax.xlane.f32.xlu0 %v320
        %v322 = vpop.xlane.xlu0 %321
        %v323 = vmax.f32 %v243, %v244
        %324 = vmax.xlane.f32.xlu0 %v323
        %v325 = vpop.xlane.xlu0 %324
        %v326 = vmax.f32 %v294, %v304
        %v327 = vmax.f32 %v295, %v307
        %v328 = vmax.f32 %v296, %v310
        %v329 = vmax.f32 %v297, %v313
        %v330 = vmax.f32 %v298, %v316
        %v331 = vmax.f32 %v299, %v319
        %v332 = vmax.f32 %v300, %v322
        %v333 = vmax.f32 %v301, %v325
        %334 = vst.msk [vmem:[#allocation3] sm:$0xff] %vm285, %v326
        %335 = vst.msk [vmem:[#allocation3 + $0x8] sm:$0xff] %vm285, %v327
        %336 = vst.msk [vmem:[#allocation3 + $0x10] sm:$0xff] %vm285, %v328
        %337 = vst.msk [vmem:[#allocation3 + $0x18] sm:$0xff] %vm285, %v329
        %338 = vst.msk [vmem:[#allocation3 + $0x20] sm:$0xff] %vm285, %v330
        %339 = vst.msk [vmem:[#allocation3 + $0x28] sm:$0xff] %vm285, %v331
        %340 = vst.msk [vmem:[#allocation3 + $0x30] sm:$0xff] %vm285, %v332
        %341 = vst.msk [vmem:[#allocation3 + $0x38] sm:$0xff] %vm285, %v333
        // Predicated region
        $region41: #{tpu_custom_call.1} parent=31 // pred_check
          %p342 = pneg %p208
        $region42: #{tpu_custom_call.1} parent=31 // pred_check_branch
          %344 = sbr.rel (%p342) target = $region44
        $region43: #{tpu_custom_call.1} parent=31 // pred_region
          %v345 = vld [vmem:[#allocation2] sm:$0xff]
          %v346 = vld [vmem:[#allocation2 + $0x8] sm:$0xff]
          %v347 = vld [vmem:[#allocation2 + $0x10] sm:$0xff]
          %v348 = vld [vmem:[#allocation2 + $0x18] sm:$0xff]
          %v349 = vld [vmem:[#allocation2 + $0x20] sm:$0xff]
          %v350 = vld [vmem:[#allocation2 + $0x28] sm:$0xff]
          %v351 = vld [vmem:[#allocation2 + $0x30] sm:$0xff]
          %v352 = vld [vmem:[#allocation2 + $0x38] sm:$0xff]
          %v353 = vmul.f32 %v345, 0.00390625
          %v354 = vmul.f32 %v346, 0.00390625
          %v355 = vmul.f32 %v347, 0.00390625
          %v356 = vmul.f32 %v348, 0.00390625
          %v357 = vmul.f32 %v349, 0.00390625
          %v358 = vmul.f32 %v350, 0.00390625
          %v359 = vmul.f32 %v351, 0.00390625
          %v360 = vmul.f32 %v352, 0.00390625
          %v361 = vld [vmem:[#allocation3] sm:$0xff]
          %v362 = vld [vmem:[#allocation3 + $0x8] sm:$0xff]
          %v363 = vld [vmem:[#allocation3 + $0x10] sm:$0xff]
          %v364 = vld [vmem:[#allocation3 + $0x18] sm:$0xff]
          %v365 = vld [vmem:[#allocation3 + $0x20] sm:$0xff]
          %v366 = vld [vmem:[#allocation3 + $0x28] sm:$0xff]
          %v367 = vld [vmem:[#allocation3 + $0x30] sm:$0xff]
          %v368 = vld [vmem:[#allocation3 + $0x38] sm:$0xff]
          %377 = vrot.lane.b32.xlu0 %v361, 1
          %v378 = vpop.permute.xlu0 %377
          %379 = vrot.lane.b32.xlu0 %v362, 1
          %v380 = vpop.permute.xlu0 %379
          %381 = vrot.lane.b32.xlu0 %v363, 1
          %v382 = vpop.permute.xlu0 %381
          %383 = vrot.lane.b32.xlu0 %v364, 1
          %v384 = vpop.permute.xlu0 %383
          %385 = vrot.lane.b32.xlu0 %v365, 1
          %v386 = vpop.permute.xlu0 %385
          %387 = vrot.lane.b32.xlu0 %v366, 1
          %v388 = vpop.permute.xlu0 %387
          %389 = vrot.lane.b32.xlu0 %v367, 1
          %v390 = vpop.permute.xlu0 %389
          %391 = vrot.lane.b32.xlu0 %v368, 1
          %v392 = vpop.permute.xlu0 %391
          %v401 = vsel %vm285, %v353, %v378
          %v402 = vsel %vm285, %v354, %v380
          %v403 = vsel %vm285, %v355, %v382
          %v404 = vsel %vm285, %v356, %v384
          %v405 = vsel %vm285, %v357, %v386
          %v406 = vsel %vm285, %v358, %v388
          %v407 = vsel %vm285, %v359, %v390
          %v408 = vsel %vm285, %v360, %v392
          %v409 = vld [vmem:[%s1] sm:$0xff]
          %vm410 = vcmask 523264
          %v412 = vsel %vm410, %v409, 0
          %414 = vmatprep.subr.mxu0 0.0
          %415 = vmatpush1.msra.mxu0 %v401
          %416 = vmatprep.subr.mxu0 0.0
          %417 = vmatpush1.msra.mxu0 %v402
          %418 = vmatprep.subr.mxu0 0.0
          %419 = vmatpush1.msra.mxu0 %v403
          %420 = vmatprep.subr.mxu0 0.0
          %421 = vmatpush1.msra.mxu0 %v404
          %422 = vmatprep.subr.mxu0 0.0
          %423 = vmatpush1.msra.mxu0 %v405
          %424 = vmatprep.subr.mxu0 0.0
          %425 = vmatpush1.msra.mxu0 %v406
          %426 = vmatprep.subr.mxu0 0.0
          %427 = vmatpush1.msra.mxu0 %v407
          %428 = vmatprep.subr.mxu0 0.0
          %429 = vmatpush1.msra.mxu0 %v408
          %430 = vmatprep.subr.mxu0 0.0
          %431 = vmatpush1.msra.mxu0 0.0
          %432 = vmatprep.subr.mxu0 0.0
          %433 = vmatpush1.msra.mxu0 0.0
          %434 = vmatprep.subr.mxu0 0.0
          %435 = vmatpush1.msra.mxu0 0.0
          %436 = vmatprep.subr.mxu0 0.0
          %437 = vmatpush1.msra.mxu0 0.0
          %438 = vmatprep.subr.mxu0 0.0
          %439 = vmatpush1.msra.mxu0 0.0
          %440 = vmatprep.subr.mxu0 0.0
          %441 = vmatpush1.msra.mxu0 0.0
          %442 = vmatprep.subr.mxu0 0.0
          %443 = vmatpush1.msra.mxu0 0.0
          %444 = vmatprep.subr.mxu0 0.0
          %445 = vmatpush1.msra.mxu0 0.0
          %446 = vmatprep.subr.mxu0 0.0
          %447 = vmatpush1.msra.mxu0 0.0
          %448 = vmatprep.subr.mxu0 0.0
          %449 = vmatpush1.msra.mxu0 0.0
          %450 = vmatprep.subr.mxu0 0.0
          %451 = vmatpush1.msra.mxu0 0.0
          %452 = vmatprep.subr.mxu0 0.0
          %453 = vmatpush1.msra.mxu0 0.0
          %454 = vmatprep.subr.mxu0 0.0
          %455 = vmatpush1.msra.mxu0 0.0
          %456 = vmatprep.subr.mxu0 0.0
          %457 = vmatpush1.msra.mxu0 0.0
          %458 = vmatprep.subr.mxu0 0.0
          %459 = vmatpush1.msra.mxu0 0.0
          %460 = vmatprep.subr.mxu0 0.0
          %461 = vmatpush1.msra.mxu0 0.0
          %462 = vmatprep.subr.mxu0 0.0
          %463 = vmatpush1.msra.mxu0 0.0
          %464 = vmatprep.subr.mxu0 0.0
          %465 = vmatpush1.msra.mxu0 0.0
          %466 = vmatprep.subr.mxu0 0.0
          %467 = vmatpush1.msra.mxu0 0.0
          %468 = vmatprep.subr.mxu0 0.0
          %469 = vmatpush1.msra.mxu0 0.0
          %470 = vmatprep.subr.mxu0 0.0
          %471 = vmatpush1.msra.mxu0 0.0
          %472 = vmatprep.subr.mxu0 0.0
          %473 = vmatpush1.msra.mxu0 0.0
          %474 = vmatprep.subr.mxu0 0.0
          %475 = vmatpush1.msra.mxu0 0.0
          %476 = vmatprep.subr.mxu0 0.0
          %477 = vmatpush1.msra.mxu0 0.0
          %478 = vmatprep.mubr.f32.mxu0 0.0
          %479 = vmatmul.mubr.f32.gmra.mrb[0].mxu0 %v412
          %v480 = vpop.f32.mrb[0].mxu0
          %v481 = vadd.f32 0.0, %v480
          %v482 = vpop.f32.mrb[0].mxu0
          %483 = vdwg.mxu0
          %vm484 = vcmp.ge.f32.partialorder %v481, 0.0
          %v485 = vmul.f32 %v481, 0.01
          %v486 = vsel %vm484, %v481, %v485
          %v487 = vld [vmem:[%s2] sm:$0xff]
          %v488 = vld [vmem:[%s2 + $0x8] sm:$0xff]
          %v489 = vld [vmem:[%s2 + $0x10] sm:$0xff]
          %v490 = vld [vmem:[%s2 + $0x18] sm:$0xff]
          %v491 = vld [vmem:[%s2 + $0x20] sm:$0xff]
          %v492 = vld [vmem:[%s2 + $0x28] sm:$0xff]
          %v493 = vld [vmem:[%s2 + $0x30] sm:$0xff]
          %v494 = vld [vmem:[%s2 + $0x38] sm:$0xff]
          %vm495 = vcmask 64512
          %v497 = vsel %vm495, %v487, 0
          %v500 = vsel %vm495, %v488, 0
          %v503 = vsel %vm495, %v489, 0
          %v506 = vsel %vm495, %v490, 0
          %v509 = vsel %vm495, %v491, 0
          %v512 = vsel %vm495, %v492, 0
          %v515 = vsel %vm495, %v493, 0
          %v518 = vsel %vm495, %v494, 0
          %520 = vmatprep.subr.mxu0 0.0
          %521 = vmatpush1.msra.mxu0 %v486
          %522 = vmatprep.subr.mxu0 0.0
          %523 = vmatpush1.msra.mxu0 0.0
          %524 = vmatprep.subr.mxu0 0.0
          %525 = vmatpush1.msra.mxu0 0.0
          %526 = vmatprep.subr.mxu0 0.0
          %527 = vmatpush1.msra.mxu0 0.0
          %528 = vmatprep.subr.mxu0 0.0
          %529 = vmatpush1.msra.mxu0 0.0
          %530 = vmatprep.subr.mxu0 0.0
          %531 = vmatpush1.msra.mxu0 0.0
          %532 = vmatprep.subr.mxu0 0.0
          %533 = vmatpush1.msra.mxu0 0.0
          %534 = vmatprep.subr.mxu0 0.0
          %535 = vmatpush1.msra.mxu0 0.0
          %536 = vmatprep.subr.mxu0 0.0
          %537 = vmatpush1.msra.mxu0 0.0
          %538 = vmatprep.subr.mxu0 0.0
          %539 = vmatpush1.msra.mxu0 0.0
          %540 = vmatprep.subr.mxu0 0.0
          %541 = vmatpush1.msra.mxu0 0.0
          %542 = vmatprep.subr.mxu0 0.0
          %543 = vmatpush1.msra.mxu0 0.0
          %544 = vmatprep.subr.mxu0 0.0
          %545 = vmatpush1.msra.mxu0 0.0
          %546 = vmatprep.subr.mxu0 0.0
          %547 = vmatpush1.msra.mxu0 0.0
          %548 = vmatprep.subr.mxu0 0.0
          %549 = vmatpush1.msra.mxu0 0.0
          %550 = vmatprep.subr.mxu0 0.0
          %551 = vmatpush1.msra.mxu0 0.0
          %552 = vmatprep.subr.mxu0 0.0
          %553 = vmatpush1.msra.mxu0 0.0
          %554 = vmatprep.subr.mxu0 0.0
          %555 = vmatpush1.msra.mxu0 0.0
          %556 = vmatprep.subr.mxu0 0.0
          %557 = vmatpush1.msra.mxu0 0.0
          %558 = vmatprep.subr.mxu0 0.0
          %559 = vmatpush1.msra.mxu0 0.0
          %560 = vmatprep.subr.mxu0 0.0
          %561 = vmatpush1.msra.mxu0 0.0
          %562 = vmatprep.subr.mxu0 0.0
          %563 = vmatpush1.msra.mxu0 0.0
          %564 = vmatprep.subr.mxu0 0.0
          %565 = vmatpush1.msra.mxu0 0.0
          %566 = vmatprep.subr.mxu0 0.0
          %567 = vmatpush1.msra.mxu0 0.0
          %568 = vmatprep.subr.mxu0 0.0
          %569 = vmatpush1.msra.mxu0 0.0
          %570 = vmatprep.subr.mxu0 0.0
          %571 = vmatpush1.msra.mxu0 0.0
          %572 = vmatprep.subr.mxu0 0.0
          %573 = vmatpush1.msra.mxu0 0.0
          %574 = vmatprep.subr.mxu0 0.0
          %575 = vmatpush1.msra.mxu0 0.0
          %576 = vmatprep.subr.mxu0 0.0
          %577 = vmatpush1.msra.mxu0 0.0
          %578 = vmatprep.subr.mxu0 0.0
          %579 = vmatpush1.msra.mxu0 0.0
          %580 = vmatprep.subr.mxu0 0.0
          %581 = vmatpush1.msra.mxu0 0.0
          %582 = vmatprep.subr.mxu0 0.0
          %583 = vmatpush1.msra.mxu0 0.0
          %584 = vmatprep.mubr.f32.mxu0 0.0
          %585 = vmatmul.mubr.f32.gmra.mrb[0].mxu0 %v497
          %v586 = vpop.f32.mrb[0].mxu0
          %v587 = vadd.f32 0.0, %v586
          %v588 = vpop.f32.mrb[0].mxu0
          %589 = vmatprep.mubr.f32.mxu0 0.0
          %590 = vmatmul.mubr.f32.gmra.mrb[0].mxu0 %v500
          %v591 = vpop.f32.mrb[0].mxu0
          %v592 = vadd.f32 0.0, %v591
          %v593 = vpop.f32.mrb[0].mxu0
          %594 = vmatprep.mubr.f32.mxu0 0.0
          %595 = vmatmul.mubr.f32.gmra.mrb[0].mxu0 %v503
          %v596 = vpop.f32.mrb[0].mxu0
          %v597 = vadd.f32 0.0, %v596
          %v598 = vpop.f32.mrb[0].mxu0
          %599 = vmatprep.mubr.f32.mxu0 0.0
          %600 = vmatmul.mubr.f32.gmra.mrb[0].mxu0 %v506
          %v601 = vpop.f32.mrb[0].mxu0
          %v602 = vadd.f32 0.0, %v601
          %v603 = vpop.f32.mrb[0].mxu0
          %604 = vmatprep.mubr.f32.mxu0 0.0
          %605 = vmatmul.mubr.f32.gmra.mrb[0].mxu0 %v509
          %v606 = vpop.f32.mrb[0].mxu0
          %v607 = vadd.f32 0.0, %v606
          %v608 = vpop.f32.mrb[0].mxu0
          %609 = vmatprep.mubr.f32.mxu0 0.0
          %610 = vmatmul.mubr.f32.gmra.mrb[0].mxu0 %v512
          %v611 = vpop.f32.mrb[0].mxu0
          %v612 = vadd.f32 0.0, %v611
          %v613 = vpop.f32.mrb[0].mxu0
          %614 = vmatprep.mubr.f32.mxu0 0.0
          %615 = vmatmul.mubr.f32.gmra.mrb[0].mxu0 %v515
          %v616 = vpop.f32.mrb[0].mxu0
          %v617 = vadd.f32 0.0, %v616
          %v618 = vpop.f32.mrb[0].mxu0
          %619 = vmatprep.mubr.f32.mxu0 0.0
          %620 = vmatmul.mubr.f32.gmra.mrb[0].mxu0 %v518
          %v621 = vpop.f32.mrb[0].mxu0
          %v622 = vadd.f32 0.0, %v621
          %v623 = vpop.f32.mrb[0].mxu0
          %624 = vdwg.mxu0
          %633 = vrot.lane.b32.xlu0 %v587, 127
          %v634 = vpop.permute.xlu0 %633
          %635 = vrot.lane.b32.xlu0 %v592, 127
          %v636 = vpop.permute.xlu0 %635
          %637 = vrot.lane.b32.xlu0 %v597, 127
          %v638 = vpop.permute.xlu0 %637
          %639 = vrot.lane.b32.xlu0 %v602, 127
          %v640 = vpop.permute.xlu0 %639
          %641 = vrot.lane.b32.xlu0 %v607, 127
          %v642 = vpop.permute.xlu0 %641
          %643 = vrot.lane.b32.xlu0 %v612, 127
          %v644 = vpop.permute.xlu0 %643
          %645 = vrot.lane.b32.xlu0 %v617, 127
          %v646 = vpop.permute.xlu0 %645
          %647 = vrot.lane.b32.xlu0 %v622, 127
          %v648 = vpop.permute.xlu0 %647
          %v657 = vadd.f32 %v587, %v634
          %v658 = vadd.f32 %v592, %v636
          %v659 = vadd.f32 %v597, %v638
          %v660 = vadd.f32 %v602, %v640
          %v661 = vadd.f32 %v607, %v642
          %v662 = vadd.f32 %v612, %v644
          %v663 = vadd.f32 %v617, %v646
          %v664 = vadd.f32 %v622, %v648
          %v665 = vsub.f32 0.0, %v657
          %v666 = vsub.f32 0.0, %v658
          %v667 = vsub.f32 0.0, %v659
          %v668 = vsub.f32 0.0, %v660
          %v669 = vsub.f32 0.0, %v661
          %v670 = vsub.f32 0.0, %v662
          %v671 = vsub.f32 0.0, %v663
          %v672 = vsub.f32 0.0, %v664
          %v673 = vmul.f32 %v665, 1.442695
          %v674 = vpow.pop %v673
          %v675 = vmul.f32 %v666, 1.442695
          %v676 = vpow.pop %v675
          %v677 = vmul.f32 %v667, 1.442695
          %v678 = vpow.pop %v677
          %v679 = vmul.f32 %v668, 1.442695
          %v680 = vpow.pop %v679
          %v681 = vmul.f32 %v669, 1.442695
          %v682 = vpow.pop %v681
          %v683 = vmul.f32 %v670, 1.442695
          %v684 = vpow.pop %v683
          %v685 = vmul.f32 %v671, 1.442695
          %v686 = vpow.pop %v685
          %v687 = vmul.f32 %v672, 1.442695
          %v688 = vpow.pop %v687
          %v689 = vadd.f32 %v674, 1.0
          %v690 = vadd.f32 %v676, 1.0
          %v691 = vadd.f32 %v678, 1.0
          %v692 = vadd.f32 %v680, 1.0
          %v693 = vadd.f32 %v682, 1.0
          %v694 = vadd.f32 %v684, 1.0
          %v695 = vadd.f32 %v686, 1.0
          %v696 = vadd.f32 %v688, 1.0
          %v697 = vrcp.pop %v689
          %v698 = vmul.f32 1.0, %v697
          %v699 = vrcp.pop %v690
          %v700 = vmul.f32 1.0, %v699
          %v701 = vrcp.pop %v691
          %v702 = vmul.f32 1.0, %v701
          %v703 = vrcp.pop %v692
          %v704 = vmul.f32 1.0, %v703
          %v705 = vrcp.pop %v693
          %v706 = vmul.f32 1.0, %v705
          %v707 = vrcp.pop %v694
          %v708 = vmul.f32 1.0, %v707
          %v709 = vrcp.pop %v695
          %v710 = vmul.f32 1.0, %v709
          %v711 = vrcp.pop %v696
          %v712 = vmul.f32 1.0, %v711
          %713 = vst.msk [vmem:[%s207] sm:$0xff] %vm285, %v698
          %714 = vst.msk [vmem:[%s207 + $0x8] sm:$0xff] %vm285, %v700
          %715 = vst.msk [vmem:[%s207 + $0x10] sm:$0xff] %vm285, %v702
          %716 = vst.msk [vmem:[%s207 + $0x18] sm:$0xff] %vm285, %v704
          %717 = vst.msk [vmem:[%s207 + $0x20] sm:$0xff] %vm285, %v706
          %718 = vst.msk [vmem:[%s207 + $0x28] sm:$0xff] %vm285, %v708
          %719 = vst.msk [vmem:[%s207 + $0x30] sm:$0xff] %vm285, %v710
          %720 = vst.msk [vmem:[%s207 + $0x38] sm:$0xff] %vm285, %v712
        $region44: #{tpu_custom_call.1} parent=31 // pred_fallthru
          _
        %p721 = scmp.lt.s32.totalorder %s21, 1
        %s722 = scalar_select %p721, %s21, 1
        %s723 = smul.addr %s722, 8
        %s724 = smul.addr %s723, 8
        %s725 = scalar_lea.vmem %s3, %s724
        // Predicated region
        $region45: #{tpu_custom_call.1} parent=31 // pred_check
          %p726 = pneg %p117
        $region46: #{tpu_custom_call.1} parent=31 // pred_check_branch
          %728 = sbr.rel (%p726) target = $region48
        $region47: #{tpu_custom_call.1} parent=31 // pred_region
          _
        $region48: #{tpu_custom_call.1} parent=31 // pred_fallthru
          _
      $region32: #{tpu_custom_call.1} parent=5 // pred_fallthru
        _
      %p729 = scmp.le.s32.totalorder 2, %s12
      // Predicated region
      $region49: #{tpu_custom_call.1} parent=5 // pred_check
        %p730 = pneg %p729
      $region50: #{tpu_custom_call.1} parent=5 // pred_check_branch
        %732 = sbr.rel (%p730) target = $region52
      $region51: #{tpu_custom_call.1} parent=5 // pred_region
        %s733 = ssub.s32 %s12, 2
        // Predicated region
        $region53: #{tpu_custom_call.1} parent=51 // pred_check
          %p734 = pneg %p123
        $region54: #{tpu_custom_call.1} parent=51 // pred_check_branch
          %736 = sbr.rel (%p734) target = $region56
        $region55: #{tpu_custom_call.1} parent=51 // pred_region
          %p737 = scmp.lt.s32.totalorder %s23, 1
          %s738 = scalar_select %p737, %s23, 1
          %s739 = smul.addr %s738, 8
          %s740 = smul.addr %s739, 8
          %s741 = scalar_lea.vmem %s3, %s740
        $region56: #{tpu_custom_call.1} parent=51 // pred_fallthru
          _
      $region52: #{tpu_custom_call.1} parent=5 // pred_fallthru
        _
    $region6: #{tpu_custom_call.1} parent=1 // loop_footer
      %s16 = sadd.s32 1, %s12
    $region7: #{tpu_custom_call.1} parent=1 // loop_footer_branch
      %11 = sbr.rel target = $region3
    $region8: #{tpu_custom_call.1} parent=1 // loop_exit
      _
    %742 = vsyncpa [#allocation5], 1
    %s743 = scalar_lea.sflag [#allocation5], 1
    %744 = vsyncpa %s743, 1

</llo_original>
